<compile_context>
chip_gen: v5e
topology: v5e:2x2
jax: 0.10.0
libtpu: 0.0.40
codegen_flags: <defaults>
</compile_context>

<pallas_src>
import numpy as np
import jax
import jax.numpy as jnp
from jax.experimental import pallas as pl
from jax.experimental.pallas import tpu as pltpu


# ----------------------------------------------------------------------------
# Generation-aware sizing helpers.
# ----------------------------------------------------------------------------
def _vmem_capacity_bytes():
    try:
        return int(pltpu.get_tpu_info().vmem_capacity_bytes)
    except Exception:
        return 64 * 1024 * 1024          # conservative: v7x per-core VMEM


def _vmem_block_budget_bytes():
    # Per-block budget; the pipeline holds up to ~5 buffered blocks (3 in + 2 out),
    # so keep single blocks at ~1/16 of physical VMEM:
    #   v5e/v6e (128 MiB) -> 8 MiB blocks,  v7x (64 MiB) -> 4 MiB blocks.
    cap = _vmem_capacity_bytes()
    return int(max(1 << 20, min(8 << 20, cap // 16)))


def _vmem_limit_bytes(block_bytes, n_buffers):
    # Explicit scoped-VMEM limit: v5e's default is only 16 MiB, so raise it when
    # blocks grow, while never exceeding ~3/4 of physical VMEM (safe on v7x).
    cap = _vmem_capacity_bytes()
    need = n_buffers * block_bytes + (2 << 20)
    return int(min(max(need, 32 << 20), (cap * 3) // 4))


def _largest_divisor_leq(n, cap):
    cap = int(max(1, min(n, cap)))
    for d in range(cap, 0, -1):
        if n % d == 0:
            return d
    return 1


def _cost_estimate(x):
    # Pure memory-bound op: read everything once, write everything once.
    nbytes = 2 * int(np.prod(x.shape)) * x.dtype.itemsize
    return pl.CostEstimate(flops=0, transcendentals=0, bytes_accessed=int(nbytes))


def _lane_dense_view(x):
    """(N, C, H, W) -> (N, C, rows, L) with L a multiple of 128, when possible."""
    N, C, H, W = x.shape
    HW = H * W
    for L in (1024, 512, 256, 128):
        if HW % L == 0:
            return x.reshape(N, C, HW // L, L), HW // L, L
    return x, H, W   # fallback: last two block dims == full extents (still legal)


# ----------------------------------------------------------------------------
# Path A: in-VMEM channel gather (small per-channel chunks).
# ----------------------------------------------------------------------------
def _vmem_gather_kernel(perm_ref, x_ref, o_ref):
    # x_ref / o_ref: (NB, C, rows, L) VMEM tiles.  Gather whole channel slabs in
    # VMEM; a dynamic-offset slice on a major (untiled) axis is plain address math.
    C = x_ref.shape[1]
    for c in range(C):
        src = perm_ref[c]
        o_ref[:, pl.ds(c, 1), :, :] = x_ref[:, pl.ds(src, 1), :, :]


def _permute_channels_vmem(x, perm):
    N, C, H, W = x.shape
    xr, rows, L = _lane_dense_view(x)
    itemsize = x.dtype.itemsize
    budget = _vmem_block_budget_bytes()

    per_batch = C * rows * L * itemsize
    nb_blk = _largest_divisor_leq(N, max(1, budget // max(per_batch, 1)))
    block = (nb_blk, C, rows, L)
    block_bytes = nb_blk * per_batch

    grid_spec = pltpu.PrefetchScalarGridSpec(
        num_scalar_prefetch=1,                       # perm lives in SMEM
        grid=(N // nb_blk,),
        in_specs=[pl.BlockSpec(block, lambda b, perm_ref: (b, 0, 0, 0))],
        out_specs=pl.BlockSpec(block, lambda b, perm_ref: (b, 0, 0, 0)),
    )
    out = pl.pallas_call(
        _vmem_gather_kernel,
        out_shape=jax.ShapeDtypeStruct(xr.shape, x.dtype),
        grid_spec=grid_spec,
        compiler_params=pltpu.CompilerParams(
            dimension_semantics=("parallel",),
            vmem_limit_bytes=_vmem_limit_bytes(block_bytes, 4),  # 2 in + 2 out bufs
        ),
        cost_estimate=_cost_estimate(x),
    )(perm, xr)
    return out.reshape(N, C, H, W)


# ----------------------------------------------------------------------------
# Path B: lane-dense BlockSpec auto-pipelined copy (large per-channel slabs).
# ----------------------------------------------------------------------------
def _copy_kernel(perm_ref, x_ref, o_ref):
    # The input BlockSpec index_map already selected source channel perm[c];
    # the body is a straight VMEM tile copy.
    o_ref[...] = x_ref[...]


def _permute_channels_blockspec(x, perm):
    N, C, H, W = x.shape
    xr, rows, L = _lane_dense_view(x)
    itemsize = x.dtype.itemsize
    budget = _vmem_block_budget_bytes()

    # Row tiling: keep one (R, L) slab per block inside the budget, honoring the
    # (8, 128) rule (R % 8 == 0 or R == rows).  Needed on v7x (64 MiB VMEM) for
    # large images; v5e/v6e only hit it at even larger H*W.
    slab_bytes = rows * L * itemsize
    if slab_bytes <= budget or rows % 8 != 0:
        R = rows
    else:
        max_r = max(8, (budget // (L * itemsize)) // 8 * 8)
        R = 8
        for cand in range(8, rows + 1, 8):
            if rows % cand == 0 and cand <= max_r:
                R = cand
    nr = rows // R

    # Batch blocking on top of the row tile, still inside the budget.
    per_batch = R * L * itemsize
    nb_blk = _largest_divisor_leq(N, max(1, budget // max(per_batch, 1)))
    nb = N // nb_blk
    block = (nb_blk, 1, R, L)
    block_bytes = nb_blk * per_batch

    grid_spec = pltpu.PrefetchScalarGridSpec(
        num_scalar_prefetch=1,
        # Fastest grid axes walk rows, then channels, of the *output* for a fixed
        # batch block -> consecutive steps write contiguous HBM.
        grid=(nb, C, nr),
        in_specs=[pl.BlockSpec(
            block,
            lambda b, c, r, perm_ref: (b, perm_ref[c], r, 0),
            pipeline_mode=pl.Buffered(3),     # hide scattered-read DMA latency
        )],
        out_specs=pl.BlockSpec(block, lambda b, c, r, perm_ref: (b, c, r, 0)),
    )
    out = pl.pallas_call(
        _copy_kernel,
        out_shape=jax.ShapeDtypeStruct(xr.shape, x.dtype),
        grid_spec=grid_spec,
        compiler_params=pltpu.CompilerParams(
            dimension_semantics=("parallel", "parallel", "arbitrary"),
            vmem_limit_bytes=_vmem_limit_bytes(block_bytes, 5),  # 3 in + 2 out bufs
        ),
        cost_estimate=_cost_estimate(x),
    )(perm, xr)
    return out.reshape(N, C, H, W)


# ----------------------------------------------------------------------------
# Path C: sliding-window HBM->HBM DMA gather (large chunks, layout-agnostic).
# ----------------------------------------------------------------------------
def _make_dma_gather_kernel(C, window):
    """Keeps `window` channel-slab DMAs in flight for the whole kernel."""

    def kernel(perm_ref, x_hbm, o_hbm, sems):
        def copy(c, slot):
            return pltpu.make_async_copy(
                x_hbm.at[:, pl.ds(perm_ref[c], 1), :, :],
                o_hbm.at[:, pl.ds(c, 1), :, :],
                sems.at[slot],
            )

        # Prime the window, then retire copy c and immediately refill its slot
        # with copy c+window, so the DMA engines never drain mid-kernel (the
        # previous version drained all in-flight copies at every grid step).
        for c in range(min(window, C)):
            copy(c, c).start()
        for c in range(C):
            slot = c % window
            copy(c, slot).wait()            # all copies have identical byte counts
            nxt = c + window
            if nxt < C:
                copy(nxt, slot).start()

    return kernel


def _permute_channels_dma(x, perm, channels_in_flight=16):
    N, C, H, W = x.shape
    window = int(max(1, min(channels_in_flight, C)))
    grid_spec = pltpu.PrefetchScalarGridSpec(
        num_scalar_prefetch=1,                         # perm lives in SMEM
        grid=(1,),
        in_specs=[pl.BlockSpec(memory_space=pl.ANY)],  # raw HBM ref, manual DMA
        out_specs=pl.BlockSpec(memory_space=pl.ANY),   # written only via DMA
        scratch_shapes=[pltpu.SemaphoreType.DMA((window,))],
    )
    return pl.pallas_call(
        _make_dma_gather_kernel(C, window),
        out_shape=jax.ShapeDtypeStruct(x.shape, x.dtype),
        grid_spec=grid_spec,
        compiler_params=pltpu.CompilerParams(
            dimension_semantics=("arbitrary",),
            has_side_effects=True,
        ),
        cost_estimate=_cost_estimate(x),
    )(perm, x)


# ----------------------------------------------------------------------------
# Public wrapper + module.
# ----------------------------------------------------------------------------
_SMALL_CHUNK_BYTES = 16 * 1024     # contiguous per-channel chunk (H*W*itemsize)


def permute_channels(x, perm, *, path=None, channels_in_flight=16):
    """y[:, i] = x[:, perm[i]] for NCHW input x (pure channel gather)."""
    if x.ndim != 4:
        raise ValueError("expected NCHW input")
    perm = jnp.asarray(perm, dtype=jnp.int32)
    N, C, H, W = x.shape
    itemsize = x.dtype.itemsize
    chunk_bytes = H * W * itemsize                       # bytes per DMA descriptor
    slab_fits = C * H * W * itemsize <= _vmem_block_budget_bytes()

    if path is None:
        if chunk_bytes <= _SMALL_CHUNK_BYTES and slab_fits:
            path = "vmem"        # tiny chunks are descriptor-bound if DMA'd per channel
        elif (H * W) % 128 == 0:
            path = "blockspec"   # lane-dense pipelined copy
        else:
            path = "dma"         # big chunks, odd layout: strided HBM->HBM DMAs
    if path == "vmem":
        return _permute_channels_vmem(x, perm)
    if path == "blockspec":
        return _permute_channels_blockspec(x, perm)
    if path == "dma":
        return _permute_channels_dma(x, perm, channels_in_flight)
    raise ValueError(f"unknown path: {path}")


class PermuteLayerPallas:
    """Random-but-fixed channel permutation (forward + rev), mirroring PermuteLayer."""

    def __init__(self, in_dim, seed):
        self.in_channels = in_dim[0][0]
        # Same permutation as np.random.seed(seed); np.random.permutation(n),
        # without mutating global NumPy RNG state.
        rng = np.random.RandomState(seed)
        self.perm = rng.permutation(self.in_channels).astype(np.int32)
        self.perm_inv = np.zeros_like(self.perm)
        for i, p in enumerate(self.perm):
            self.perm_inv[p] = i
        self._perm_j = jnp.asarray(self.perm)
        self._perm_inv_j = jnp.asarray(self.perm_inv)

    def forward(self, x, rev=False):
        # x is a list with one NCHW array, following the FrEIA convention.
        perm = self._perm_inv_j if rev else self._perm_j
        return [permute_channels(x[0], perm)]

    def output_dims(self, in_dim):
        return in_dim


if __name__ == "__main__":
    key = jax.random.PRNGKey(0)
    k0, k1, k2 = jax.random.split(key, 3)

    N, C, H, W = 2, 4, 16, 16
    x = jax.random.normal(k0, (N, C, H, W), dtype=jnp.float32)

    layer = PermuteLayerPallas(in_dim=[(C, H, W)], seed=0)
    perm = jnp.asarray(layer.perm)
    ref = x[:, layer.perm]

    # Default dispatch (small chunks -> in-VMEM gather): forward + inverse.
    y = jax.block_until_ready(layer.forward([x], rev=False)[0])
    assert jnp.array_equal(y, ref), "forward permutation mismatch (vmem path)"
    x_back = jax.block_until_ready(layer.forward([y], rev=True)[0])
    assert jnp.array_equal(x_back, x), "inverse permutation mismatch (vmem path)"

    # Sliding-window HBM->HBM DMA gather path, forced (full and partial windows).
    y_dma = jax.block_until_ready(permute_channels(x, perm, path="dma"))
    assert jnp.array_equal(y_dma, ref), "dma path mismatch"
    y_dma3 = jax.block_until_ready(
        permute_channels(x, perm, path="dma", channels_in_flight=3))
    assert jnp.array_equal(y_dma3, ref), "dma path (window=3) mismatch"

    # Lane-dense BlockSpec copy path, forced at a small shape (H*W = 256).
    y_blk = jax.block_until_ready(permute_channels(x, perm, path="blockspec"))
    assert jnp.array_equal(y_blk, ref), "blockspec path mismatch"

    # Shape that naturally dispatches to the blockspec path (32 KiB chunks).
    x2 = jax.random.normal(k1, (2, C, 64, 128), dtype=jnp.float32)
    y2 = jax.block_until_ready(permute_channels(x2, perm))
    assert jnp.array_equal(y2, x2[:, layer.perm]), "large-chunk dispatch mismatch"

    # Spatial size not a multiple of 128: stays on the in-VMEM gather path.
    x3 = jax.random.normal(k2, (2, C, 6, 10), dtype=jnp.float32)
    y3 = jax.block_until_ready(permute_channels(x3, perm))
    assert jnp.array_equal(y3, x3[:, layer.perm]), "non-lane-aligned shape mismatch"

    print("KERNEL_OK")
</pallas_src>

<mosaic_0001>
module attributes {stable_mosaic.version = 11 : i64} {
  func.func @_vmem_gather_kernel(%arg0: i32, %arg1: memref<4xi32, #tpu.memory_space<smem>>, %arg2: memref<2x4x1x256xf32, #tpu.memory_space<vmem>>, %arg3: memref<2x4x1x256xf32, #tpu.memory_space<vmem>>) attributes {dimension_semantics = [#tpu.dimension_semantics<parallel>], iteration_bounds = array<i64: 1>, scalar_prefetch = 1 : i64, scratch_operands = 0 : i64, tpu.core_type = #tpu.core_type<tc>, window_params = [{transform_indices = @transform_0, window_bounds = array<i64: 2, 4, 1, 256>}, {transform_indices = @transform_1, window_bounds = array<i64: 2, 4, 1, 256>}]} {
    %c0 = arith.constant 0 : index
    %0 = memref.load %arg1[%c0] : memref<4xi32, #tpu.memory_space<smem>>
    %c0_0 = arith.constant 0 : index
    %1 = arith.index_cast %0 : i32 to index
    %c0_1 = arith.constant 0 : index
    %c0_2 = arith.constant 0 : index
    %2 = vector.load %arg2[%c0_0, %1, %c0_1, %c0_2] : memref<2x4x1x256xf32, #tpu.memory_space<vmem>>, vector<2x1x1x256xf32>
    %c0_3 = arith.constant 0 : index
    %c0_4 = arith.constant 0 : index
    %c0_5 = arith.constant 0 : index
    %c0_6 = arith.constant 0 : index
    %3 = vector.load %arg3[%c0_3, %c0_4, %c0_5, %c0_6] : memref<2x4x1x256xf32, #tpu.memory_space<vmem>>, vector<2x1x1x256xf32>
    tpu.vector_store %arg3[%c0_3, %c0_4, %c0_5, %c0_6], %2 {strides = array<i32>} : memref<2x4x1x256xf32, #tpu.memory_space<vmem>>, vector<2x1x1x256xf32>,
    %c1 = arith.constant 1 : index
    %4 = memref.load %arg1[%c1] : memref<4xi32, #tpu.memory_space<smem>>
    %c0_7 = arith.constant 0 : index
    %5 = arith.index_cast %4 : i32 to index
    %c0_8 = arith.constant 0 : index
    %c0_9 = arith.constant 0 : index
    %6 = vector.load %arg2[%c0_7, %5, %c0_8, %c0_9] : memref<2x4x1x256xf32, #tpu.memory_space<vmem>>, vector<2x1x1x256xf32>
    %c0_10 = arith.constant 0 : index
    %c1_11 = arith.constant 1 : index
    %c0_12 = arith.constant 0 : index
    %c0_13 = arith.constant 0 : index
    %7 = vector.load %arg3[%c0_10, %c1_11, %c0_12, %c0_13] : memref<2x4x1x256xf32, #tpu.memory_space<vmem>>, vector<2x1x1x256xf32>
    tpu.vector_store %arg3[%c0_10, %c1_11, %c0_12, %c0_13], %6 {strides = array<i32>} : memref<2x4x1x256xf32, #tpu.memory_space<vmem>>, vector<2x1x1x256xf32>,
    %c2 = arith.constant 2 : index
    %8 = memref.load %arg1[%c2] : memref<4xi32, #tpu.memory_space<smem>>
    %c0_14 = arith.constant 0 : index
    %9 = arith.index_cast %8 : i32 to index
    %c0_15 = arith.constant 0 : index
    %c0_16 = arith.constant 0 : index
    %10 = vector.load %arg2[%c0_14, %9, %c0_15, %c0_16] : memref<2x4x1x256xf32, #tpu.memory_space<vmem>>, vector<2x1x1x256xf32>
    %c0_17 = arith.constant 0 : index
    %c2_18 = arith.constant 2 : index
    %c0_19 = arith.constant 0 : index
    %c0_20 = arith.constant 0 : index
    %11 = vector.load %arg3[%c0_17, %c2_18, %c0_19, %c0_20] : memref<2x4x1x256xf32, #tpu.memory_space<vmem>>, vector<2x1x1x256xf32>
    tpu.vector_store %arg3[%c0_17, %c2_18, %c0_19, %c0_20], %10 {strides = array<i32>} : memref<2x4x1x256xf32, #tpu.memory_space<vmem>>, vector<2x1x1x256xf32>,
    %c3 = arith.constant 3 : index
    %12 = memref.load %arg1[%c3] : memref<4xi32, #tpu.memory_space<smem>>
    %c0_21 = arith.constant 0 : index
    %13 = arith.index_cast %12 : i32 to index
    %c0_22 = arith.constant 0 : index
    %c0_23 = arith.constant 0 : index
    %14 = vector.load %arg2[%c0_21, %13, %c0_22, %c0_23] : memref<2x4x1x256xf32, #tpu.memory_space<vmem>>, vector<2x1x1x256xf32>
    %c0_24 = arith.constant 0 : index
    %c3_25 = arith.constant 3 : index
    %c0_26 = arith.constant 0 : index
    %c0_27 = arith.constant 0 : index
    %15 = vector.load %arg3[%c0_24, %c3_25, %c0_26, %c0_27] : memref<2x4x1x256xf32, #tpu.memory_space<vmem>>, vector<2x1x1x256xf32>
    tpu.vector_store %arg3[%c0_24, %c3_25, %c0_26, %c0_27], %14 {strides = array<i32>} : memref<2x4x1x256xf32, #tpu.memory_space<vmem>>, vector<2x1x1x256xf32>,
    return
  }
  func.func @transform_0(%arg0: i32, %arg1: memref<4xi32, #tpu.memory_space<smem>>) -> (i32, i32, i32, i32) {
    %c0_i32 = arith.constant 0 : i32
    %c0_i32_0 = arith.constant 0 : i32
    %c0_i32_1 = arith.constant 0 : i32
    %c0_i32_2 = arith.constant 0 : i32
    return %arg0, %c0_i32, %c0_i32_0, %c0_i32_1 : i32, i32, i32, i32
  }
  func.func @transform_1(%arg0: i32, %arg1: memref<4xi32, #tpu.memory_space<smem>>) -> (i32, i32, i32, i32) {
    %c0_i32 = arith.constant 0 : i32
    %c0_i32_0 = arith.constant 0 : i32
    %c0_i32_1 = arith.constant 0 : i32
    %c0_i32_2 = arith.constant 0 : i32
    return %arg0, %c0_i32, %c0_i32_0, %c0_i32_1 : i32, i32, i32, i32
  }
}

</mosaic_0001>

<llo_original>
// kernel: tpu_custom_call.1
$region0: #{tpu_custom_call.1}
  #allocation0 [shape = 'u32[]', space=smem, size = 0x4, offset = 0x4, fixed_abs, tag = 'smem constant byte address 0x4 - core index']
  #allocation1 [shape = 'u32[72,128]{1,0:T(1,128)}', space=vmem, size = 0x9000, scoped, tag = 'internal scratch']
  #allocation2 [shape = 's32[1]{0}', space=sflag, size = 0x4, scoped, tag = 'scoped memory for tpu_custom_call.1']
  #allocation3 [shape = 'u8[512]{0}', space=smem, size = 0x200, scoped, tag = 'prefetched SMEM operand 0']
  %s0 = inlined_call_operand.hbm [shape: s32[4], index: 0, kind: input, shape index: {}]
  %s1 = inlined_call_operand.hbm [shape: f32[2,4,1,256], index: 1, kind: input, shape index: {}]
  %s2 = inlined_call_operand.hbm [shape: f32[2,4,1,256], index: 2, kind: output, shape index: {}]
  %s3 = sld [smem:[#allocation0]]
  $region18: #{tpu_custom_call.1} parent=0
    _
  %s5 = ssub.s32 1, %s3
  %s6 = scalar_select 0, %s5, %s3
  %s8 = sshll.u32 %s0, 4
  %s9 = int_to_ptr.hbm [resolvable:$true] %s8
  %11 = dma.hbm_to_smem %s9, 16, [#allocation3], [#allocation2]
  %13 = dma.done [#allocation2], 16
  %14 = sfence
  $region1: #{tpu_custom_call.1} parent=0
    #allocation4 [shape = 'u8[8192]{0}', space=vmem, size = 0x2000, scoped, tag = 'input window, operand 1, single buffered']
    #allocation5 [shape = 's32[1]{0}', space=sflag, size = 0x4, scoped, tag = 'scoped memory for tpu_custom_call.1']
    #allocation6 [shape = 's32[1]{0}', space=sflag, size = 0x4, scoped, tag = 'scoped memory for tpu_custom_call.1']
    #allocation7 [shape = 'u8[8192]{0}', space=vmem, size = 0x2000, scoped, tag = 'output window, operand 0, single buffered']
    %15 = vsyncpa [#allocation5], 0
    %16 = vsyncpa [#allocation6], 0
    // Predicated region
    $region2: #{tpu_custom_call.1} parent=1 // pred_check
      _
    $region3: #{tpu_custom_call.1} parent=1 // pred_check_branch
      %18 = sbr.rel (0) target = $region5
    $region4: #{tpu_custom_call.1} parent=1 // pred_region
      %20 = vsyncadd [#allocation5], 0
      %s21 = sshll.u32 %s1, 4
      %s22 = int_to_ptr.hbm [resolvable:$true] %s21
      %s23 = sshll.u32 [#allocation4], 4
      %s24 = int_to_ptr.vmem [resolvable:$true] %s23
      %29 = dma.hbm_to_vmem [thread:$0]  %s22, 256, %s24, [#allocation5], 32, 32, 2
    $region5: #{tpu_custom_call.1} parent=1 // pred_fallthru
      _
    // Predicated region
    $region6: #{tpu_custom_call.1} parent=1 // pred_check
      _
    $region7: #{tpu_custom_call.1} parent=1 // pred_check_branch
      %31 = sbr.rel (0) target = $region9
    $region8: #{tpu_custom_call.1} parent=1 // pred_region
      %33 = dma.done [#allocation5], 256
    $region9: #{tpu_custom_call.1} parent=1 // pred_fallthru
      _
    %s34 = sld [smem:[#allocation3]]
    %s35 = smul.u32 %s34, 2
    %s36 = scalar_lea.vmem [#allocation4], %s35
    %v37 = vld [vmem:[%s36] sm:$0x3]
    %v38 = vld [vmem:[%s36 + $0x8] sm:$0x3]
    %v39 = vlaneseq
    %vm40 = vcmp.ge.s32.totalorder %v39, 0
    %vm41 = vcmp.lt.s32.totalorder %v39, 256
    %vm42 = vmand %vm40, %vm41
    %43 = vst.msk [vmem:[#allocation7] sm:$0x3] %vm42, %v37
    %44 = vst.msk [vmem:[#allocation7 + $0x8] sm:$0x3] %vm42, %v38
    %s45 = sld [smem:[#allocation3 + $0x1]]
    %s46 = smul.u32 %s45, 2
    %s47 = scalar_lea.vmem [#allocation4], %s46
    %v48 = vld [vmem:[%s47] sm:$0x3]
    %v49 = vld [vmem:[%s47 + $0x8] sm:$0x3]
    %s50 = scalar_lea.vmem [#allocation7], 2
    %51 = vst.msk [vmem:[%s50] sm:$0x3] %vm42, %v48
    %52 = vst.msk [vmem:[%s50 + $0x8] sm:$0x3] %vm42, %v49
    %s53 = sld [smem:[#allocation3 + $0x2]]
    %s54 = smul.u32 %s53, 2
    %s55 = scalar_lea.vmem [#allocation4], %s54
    %v56 = vld [vmem:[%s55] sm:$0x3]
    %v57 = vld [vmem:[%s55 + $0x8] sm:$0x3]
    %s58 = scalar_lea.vmem [#allocation7], 4
    %59 = vst.msk [vmem:[%s58] sm:$0x3] %vm42, %v56
    %60 = vst.msk [vmem:[%s58 + $0x8] sm:$0x3] %vm42, %v57
    %s61 = sld [smem:[#allocation3 + $0x3]]
    %s62 = smul.u32 %s61, 2
    %s63 = scalar_lea.vmem [#allocation4], %s62
    %v64 = vld [vmem:[%s63] sm:$0x3]
    %v65 = vld [vmem:[%s63 + $0x8] sm:$0x3]
    %s66 = scalar_lea.vmem [#allocation7], 6
    %67 = vst.msk [vmem:[%s66] sm:$0x3] %vm42, %v64
    %68 = vst.msk [vmem:[%s66 + $0x8] sm:$0x3] %vm42, %v65
    // Predicated region
    $region10: #{tpu_custom_call.1} parent=1 // pred_check
      _
    $region11: #{tpu_custom_call.1} parent=1 // pred_check_branch
      %70 = sbr.rel (0) target = $region13
    $region12: #{tpu_custom_call.1} parent=1 // pred_region
      %72 = vsyncadd [#allocation6], 0
      %s73 = sshll.u32 [#allocation7], 4
      %s74 = int_to_ptr.vmem [resolvable:$true] %s73
      %s75 = sshll.u32 %s2, 4
      %s76 = int_to_ptr.hbm [resolvable:$true] %s75
      %81 = dma.vmem_to_hbm [thread:$0]  %s74, 256, %s76, [#allocation6], 32, 32, 2
    $region13: #{tpu_custom_call.1} parent=1 // pred_fallthru
      _
    // Predicated region
    $region14: #{tpu_custom_call.1} parent=1 // pred_check
      _
    $region15: #{tpu_custom_call.1} parent=1 // pred_check_branch
      %83 = sbr.rel (0) target = $region17
    $region16: #{tpu_custom_call.1} parent=1 // pred_region
      %85 = dma.done [#allocation6], 256
    $region17: #{tpu_custom_call.1} parent=1 // pred_fallthru
      _
    %86 = vsyncpa [#allocation5], 1
    %87 = vsyncpa [#allocation6], 1

</llo_original>
